<compile_context>
chip_gen: v5e
topology: v5e:2x2
jax: 0.10.0
libtpu: 0.0.40
codegen_flags: <defaults>
</compile_context>

<pallas_src>
import math

import jax
import jax.numpy as jnp
import numpy as np
from jax.experimental import pallas as pl
from jax.experimental.pallas import tpu as pltpu


# ----------------------------------------------------------------------------
# Gaussian filter construction (matches get_gaussian_kernel in the module).
# ----------------------------------------------------------------------------
def _gaussian_kernel_2d(kernel_size=3, sigma=2.0):
    """The torch module's 2-D filter (same for every channel)."""
    coords = np.arange(kernel_size, dtype=np.float64)
    x_grid = np.tile(coords, (kernel_size, 1))   # x_grid[i, j] = j
    y_grid = x_grid.T                            # y_grid[i, j] = i
    mean = (kernel_size - 1) / 2.0
    variance = sigma ** 2.0
    g = (1.0 / (2.0 * math.pi * variance)) * np.exp(
        -((x_grid - mean) ** 2.0 + (y_grid - mean) ** 2.0) / (2.0 * variance)
    )
    g = g / np.sum(g)
    return g.astype(np.float32)  # (3, 3)


def _gaussian_taps_1d(kernel_size=3, sigma=2.0):
    """1-D taps g1 with outer(g1, g1) == _gaussian_kernel_2d (exact in math:
    the exp factorizes and the normalizations cancel)."""
    coords = np.arange(kernel_size, dtype=np.float64)
    mean = (kernel_size - 1) / 2.0
    g = np.exp(-((coords - mean) ** 2.0) / (2.0 * sigma ** 2.0))
    g = g / np.sum(g)
    return g.astype(np.float32)  # (3,)


# ----------------------------------------------------------------------------
# Pallas kernel
# ----------------------------------------------------------------------------
def _make_color_loss_kernel(TB, H, W, g1):
    gc = float(g1[1])  # center tap
    ge = float(g1[0])  # edge tap (g1[0] == g1[2] by symmetry)

    def kernel(x1_ref, x2_ref, o_ref, acc_ref):
        inner = pl.program_id(1)

        @pl.when(inner == 0)
        def _init():
            acc_ref[...] = jnp.zeros_like(acc_ref)

        # Linearity: blur(x1) - blur(x2) == blur(x1 - x2).
        d = x1_ref[...].astype(jnp.float32) - x2_ref[...].astype(jnp.float32)

        # Separable 3-tap blur; zero-padding halo handled with zero edges.
        # Row pass (W / lane axis).
        zc = jnp.zeros((TB, H, 1), jnp.float32)
        left = jnp.concatenate([zc, d[:, :, : W - 1]], axis=2)   # d[h, w-1]
        right = jnp.concatenate([d[:, :, 1:], zc], axis=2)       # d[h, w+1]
        r = gc * d + ge * (left + right)

        # Column pass (H / sublane axis).
        zr = jnp.zeros((TB, 1, W), jnp.float32)
        up = jnp.concatenate([zr, r[:, : H - 1, :]], axis=1)     # r[h-1, w]
        down = jnp.concatenate([r[:, 1:, :], zr], axis=1)        # r[h+1, w]
        blur_d = gc * r + ge * (up + down)

        # Elementwise (vector) accumulation — pure VPU, no per-step reduce.
        acc_ref[...] = acc_ref[...] + blur_d * blur_d

        @pl.when(inner == pl.num_programs(1) - 1)
        def _finalize():
            # Single cross-lane reduction per outer block.
            o_ref[...] = jnp.sum(acc_ref[...], keepdims=True)

    return kernel


def _pick_tb(B, plane_bytes, budget_bytes):
    """Largest divisor of B whose block fits the budget; prefer an even block
    count so the outer grid axis can split across v7x's two TensorCores."""
    max_tb = max(1, int(budget_bytes // max(1, plane_bytes)))
    best = 1
    for tb in range(1, min(B, max_tb) + 1):
        if B % tb == 0:
            best = tb
    if (B // best) % 2 == 1 and best % 2 == 0:
        best //= 2  # make the number of blocks even (megacore split)
    return best


def color_loss(x1, x2, *, block_bytes=1 << 20):
    """x1, x2: (N, C, H, W). Returns scalar MSE(blur(x1), blur(x2))."""
    assert x1.shape == x2.shape and x1.ndim == 4
    N, C, H, W = x1.shape
    B = N * C

    # Depthwise conv uses the identical filter per channel -> flatten (N, C).
    x1f = x1.reshape(B, H, W)
    x2f = x2.reshape(B, H, W)

    g1 = _gaussian_taps_1d(kernel_size=3, sigma=2.0)

    TB = _pick_tb(B, H * W * 4, block_bytes)
    n_blocks = B // TB
    G0 = 2 if (n_blocks % 2 == 0) else 1   # outer ("parallel") axis: megacore
    G1 = n_blocks // G0                    # inner ("arbitrary") accumulation axis

    kernel = _make_color_loss_kernel(TB, H, W, g1)

    partials = pl.pallas_call(
        kernel,
        out_shape=jax.ShapeDtypeStruct((G0, 1, 1), jnp.float32),
        grid=(G0, G1),
        in_specs=[
            pl.BlockSpec((TB, H, W), lambda o, i: (o * G1 + i, 0, 0)),
            pl.BlockSpec((TB, H, W), lambda o, i: (o * G1 + i, 0, 0)),
        ],
        out_specs=pl.BlockSpec((1, 1, 1), lambda o, i: (o, 0, 0)),
        scratch_shapes=[pltpu.VMEM((TB, H, W), jnp.float32)],
        compiler_params=pltpu.CompilerParams(
            dimension_semantics=("parallel", "arbitrary"),
            vmem_limit_bytes=32 * 1024 * 1024,
        ),
    )(x1f, x2f)

    # MSELoss(reduction='mean') over all N*C*H*W elements.
    return jnp.sum(partials) / jnp.float32(B * H * W)


# ----------------------------------------------------------------------------
# Pure-JAX reference (depthwise conv with the torch-style 2-D kernel).
# ----------------------------------------------------------------------------
def color_loss_ref(x1, x2):
    g = _gaussian_kernel_2d()
    N, C, H, W = x1.shape
    w = jnp.broadcast_to(jnp.asarray(g)[None, None], (C, 1, 3, 3))
    dn = jax.lax.conv_dimension_numbers(x1.shape, w.shape,
                                        ("NCHW", "OIHW", "NCHW"))
    b1 = jax.lax.conv_general_dilated(x1, w, (1, 1), [(1, 1), (1, 1)],
                                      dimension_numbers=dn,
                                      feature_group_count=C)
    b2 = jax.lax.conv_general_dilated(x2, w, (1, 1), [(1, 1), (1, 1)],
                                      dimension_numbers=dn,
                                      feature_group_count=C)
    return jnp.mean((b1 - b2) ** 2)


if __name__ == "__main__":
    key = jax.random.PRNGKey(0)
    k1, k2, k3, k4 = jax.random.split(key, 4)

    # Main test: matches the module (channels must be 3 for the blur layer).
    x1 = jax.random.normal(k1, (2, 3, 16, 16), dtype=jnp.float32)
    x2 = jax.random.normal(k2, (2, 3, 16, 16), dtype=jnp.float32)
    out = color_loss(x1, x2)
    jax.block_until_ready(out)
    ref = color_loss_ref(x1, x2)
    np.testing.assert_allclose(np.asarray(out), np.asarray(ref),
                               rtol=1e-5, atol=1e-6)

    # Exercise the multi-step accumulation and the 2-way "parallel" outer axis
    # by forcing one plane per block (TB=1 -> 6 blocks -> grid (2, 3)).
    y1 = jax.random.normal(k3, (2, 3, 24, 32), dtype=jnp.float32)
    y2 = jax.random.normal(k4, (2, 3, 24, 32), dtype=jnp.float32)
    out2 = color_loss(y1, y2, block_bytes=24 * 32 * 4)
    jax.block_until_ready(out2)
    ref2 = color_loss_ref(y1, y2)
    np.testing.assert_allclose(np.asarray(out2), np.asarray(ref2),
                               rtol=1e-5, atol=1e-6)

    print("KERNEL_OK")
</pallas_src>

<mosaic_0001>
module attributes {stable_mosaic.version = 11 : i64} {
  func.func @kernel(%arg0: i32, %arg1: i32, %arg2: memref<3x16x16xf32, #tpu.memory_space<vmem>>, %arg3: memref<3x16x16xf32, #tpu.memory_space<vmem>>, %arg4: memref<1x1x1xf32, #tpu.memory_space<vmem>>, %arg5: memref<3x16x16xf32, #tpu.memory_space<vmem>>) attributes {dimension_semantics = [#tpu.dimension_semantics<parallel>, #tpu.dimension_semantics<arbitrary>], iteration_bounds = array<i64: 2, 1>, scalar_prefetch = 0 : i64, scratch_operands = 1 : i64, tpu.core_type = #tpu.core_type<tc>, window_params = [{transform_indices = @transform_0, window_bounds = array<i64: 3, 16, 16>}, {transform_indices = @transform_1, window_bounds = array<i64: 3, 16, 16>}, {transform_indices = @transform_2, window_bounds = array<i64: 1, 1, 1>}]} {
    %c0_i32 = arith.constant 0 : i32
    %0 = arith.cmpi eq, %arg1, %c0_i32 : i32
    %1 = arith.extui %0 : i1 to i32
    %c0_i32_0 = arith.constant 0 : i32
    %2 = arith.cmpi ne, %1, %c0_i32_0 : i32
    scf.if %2 {
      %cst_19 = arith.constant 0.000000e+00 : f32
      %35 = vector.broadcast %cst_19 : f32 to vector<3x16x16xf32>
      %c0_20 = arith.constant 0 : index
      %c0_21 = arith.constant 0 : index
      %c0_22 = arith.constant 0 : index
      %36 = vector.load %arg5[%c0_20, %c0_21, %c0_22] : memref<3x16x16xf32, #tpu.memory_space<vmem>>, vector<3x16x16xf32>
      tpu.vector_store %arg5[%c0_20, %c0_21, %c0_22], %35 {strides = array<i32>} : memref<3x16x16xf32, #tpu.memory_space<vmem>>, vector<3x16x16xf32>,
    } else {
    }
    %c0 = arith.constant 0 : index
    %c0_1 = arith.constant 0 : index
    %c0_2 = arith.constant 0 : index
    %3 = vector.load %arg2[%c0, %c0_1, %c0_2] : memref<3x16x16xf32, #tpu.memory_space<vmem>>, vector<3x16x16xf32>
    %c0_3 = arith.constant 0 : index
    %c0_4 = arith.constant 0 : index
    %c0_5 = arith.constant 0 : index
    %4 = vector.load %arg3[%c0_3, %c0_4, %c0_5] : memref<3x16x16xf32, #tpu.memory_space<vmem>>, vector<3x16x16xf32>
    %5 = arith.subf %3, %4 : vector<3x16x16xf32>
    %cst = arith.constant 0.000000e+00 : f32
    %6 = vector.broadcast %cst : f32 to vector<3x16x1xf32>
    %7 = vector.extract_strided_slice %5 {offsets = [0, 0, 0], sizes = [3, 16, 15], strides = [1, 1, 1]} : vector<3x16x16xf32> to vector<3x16x15xf32>
    %8 = tpu.concatenate %6, %7 in 2 : vector<3x16x1xf32>, vector<3x16x15xf32> -> vector<3x16x16xf32>
    %9 = vector.extract_strided_slice %5 {offsets = [0, 0, 1], sizes = [3, 16, 15], strides = [1, 1, 1]} : vector<3x16x16xf32> to vector<3x16x15xf32>
    %10 = tpu.concatenate %9, %6 in 2 : vector<3x16x15xf32>, vector<3x16x1xf32> -> vector<3x16x16xf32>
    %cst_6 = arith.constant 0.361664474 : f32
    %11 = vector.broadcast %cst_6 : f32 to vector<3x16x16xf32>
    %12 = arith.mulf %11, %5 : vector<3x16x16xf32>
    %13 = arith.addf %8, %10 : vector<3x16x16xf32>
    %cst_7 = arith.constant 0.319167763 : f32
    %14 = vector.broadcast %cst_7 : f32 to vector<3x16x16xf32>
    %15 = arith.mulf %14, %13 : vector<3x16x16xf32>
    %16 = arith.addf %12, %15 : vector<3x16x16xf32>
    %cst_8 = arith.constant 0.000000e+00 : f32
    %17 = vector.broadcast %cst_8 : f32 to vector<3x1x16xf32>
    %18 = vector.extract_strided_slice %16 {offsets = [0, 0, 0], sizes = [3, 15, 16], strides = [1, 1, 1]} : vector<3x16x16xf32> to vector<3x15x16xf32>
    %19 = tpu.concatenate %17, %18 in 1 : vector<3x1x16xf32>, vector<3x15x16xf32> -> vector<3x16x16xf32>
    %20 = vector.extract_strided_slice %16 {offsets = [0, 1, 0], sizes = [3, 15, 16], strides = [1, 1, 1]} : vector<3x16x16xf32> to vector<3x15x16xf32>
    %21 = tpu.concatenate %20, %17 in 1 : vector<3x15x16xf32>, vector<3x1x16xf32> -> vector<3x16x16xf32>
    %cst_9 = arith.constant 0.361664474 : f32
    %22 = vector.broadcast %cst_9 : f32 to vector<3x16x16xf32>
    %23 = arith.mulf %22, %16 : vector<3x16x16xf32>
    %24 = arith.addf %19, %21 : vector<3x16x16xf32>
    %cst_10 = arith.constant 0.319167763 : f32
    %25 = vector.broadcast %cst_10 : f32 to vector<3x16x16xf32>
    %26 = arith.mulf %25, %24 : vector<3x16x16xf32>
    %27 = arith.addf %23, %26 : vector<3x16x16xf32>
    %c0_11 = arith.constant 0 : index
    %c0_12 = arith.constant 0 : index
    %c0_13 = arith.constant 0 : index
    %28 = vector.load %arg5[%c0_11, %c0_12, %c0_13] : memref<3x16x16xf32, #tpu.memory_space<vmem>>, vector<3x16x16xf32>
    %29 = arith.mulf %27, %27 : vector<3x16x16xf32>
    %30 = arith.addf %28, %29 : vector<3x16x16xf32>
    %c0_14 = arith.constant 0 : index
    %c0_15 = arith.constant 0 : index
    %c0_16 = arith.constant 0 : index
    %31 = vector.load %arg5[%c0_14, %c0_15, %c0_16] : memref<3x16x16xf32, #tpu.memory_space<vmem>>, vector<3x16x16xf32>
    tpu.vector_store %arg5[%c0_14, %c0_15, %c0_16], %30 {strides = array<i32>} : memref<3x16x16xf32, #tpu.memory_space<vmem>>, vector<3x16x16xf32>,
    %c0_i32_17 = arith.constant 0 : i32
    %32 = arith.cmpi eq, %arg1, %c0_i32_17 : i32
    %33 = arith.extui %32 : i1 to i32
    %c0_i32_18 = arith.constant 0 : i32
    %34 = arith.cmpi ne, %33, %c0_i32_18 : i32
    scf.if %34 {
      %c0_19 = arith.constant 0 : index
      %c0_20 = arith.constant 0 : index
      %c0_21 = arith.constant 0 : index
      %35 = vector.load %arg5[%c0_19, %c0_20, %c0_21] : memref<3x16x16xf32, #tpu.memory_space<vmem>>, vector<3x16x16xf32>
      %36 = vector.shape_cast %35 : vector<3x16x16xf32> to vector<1x3x16x16xf32>
      %cst_22 = arith.constant dense<0.000000e+00> : vector<1xf32>
      %37 = vector.multi_reduction <add>, %36, %cst_22 [1, 2, 3] : vector<1x3x16x16xf32> to vector<1xf32>
      %38 = vector.shape_cast %37 : vector<1xf32> to vector<1x1x1x1xf32>
      %39 = vector.extract %38[0, 0, 0, 0] : f32 from vector<1x1x1x1xf32>
      %40 = vector.broadcast %39 : f32 to vector<1x1x1xf32>
      %c0_23 = arith.constant 0 : index
      %c0_24 = arith.constant 0 : index
      %c0_25 = arith.constant 0 : index
      %41 = vector.load %arg4[%c0_23, %c0_24, %c0_25] : memref<1x1x1xf32, #tpu.memory_space<vmem>>, vector<1x1x1xf32>
      tpu.vector_store %arg4[%c0_23, %c0_24, %c0_25], %40 {strides = array<i32>} : memref<1x1x1xf32, #tpu.memory_space<vmem>>, vector<1x1x1xf32>,
    } else {
    }
    return
  }
  func.func @transform_0(%arg0: i32, %arg1: i32) -> (i32, i32, i32) {
    %c1_i32 = arith.constant 1 : i32
    %0 = arith.muli %arg0, %c1_i32 : i32
    %1 = arith.addi %0, %arg1 : i32
    %c0_i32 = arith.constant 0 : i32
    %c0_i32_0 = arith.constant 0 : i32
    %c0_i32_1 = arith.constant 0 : i32
    return %1, %c0_i32, %c0_i32_0 : i32, i32, i32
  }
  func.func @transform_1(%arg0: i32, %arg1: i32) -> (i32, i32, i32) {
    %c1_i32 = arith.constant 1 : i32
    %0 = arith.muli %arg0, %c1_i32 : i32
    %1 = arith.addi %0, %arg1 : i32
    %c0_i32 = arith.constant 0 : i32
    %c0_i32_0 = arith.constant 0 : i32
    %c0_i32_1 = arith.constant 0 : i32
    return %1, %c0_i32, %c0_i32_0 : i32, i32, i32
  }
  func.func @transform_2(%arg0: i32, %arg1: i32) -> (i32, i32, i32) {
    %c0_i32 = arith.constant 0 : i32
    %c0_i32_0 = arith.constant 0 : i32
    %c0_i32_1 = arith.constant 0 : i32
    return %arg0, %c0_i32, %c0_i32_0 : i32, i32, i32
  }
}

</mosaic_0001>

<llo_original>
// kernel: tpu_custom_call.1
$region0: #{tpu_custom_call.1}
  #allocation0 [shape = 'u32[]', space=smem, size = 0x4, offset = 0x4, fixed_abs, tag = 'smem constant byte address 0x4 - core index']
  #allocation1 [shape = 'u32[72,128]{1,0:T(1,128)}', space=vmem, size = 0x9000, scoped, tag = 'internal scratch']
  #allocation2 [shape = 'f32[3,16,16]{2,1,0:T(8,128)}', space=vmem, size = 0x6000, scoped, tag = 'scratch operand']
  %s0 = inlined_call_operand.hbm [shape: f32[6,16,16], index: 0, kind: input, shape index: {}]
  %s1 = inlined_call_operand.hbm [shape: f32[6,16,16], index: 1, kind: input, shape index: {}]
  %s2 = inlined_call_operand.vmem [shape: f32[2,1,1], index: 2, kind: output, shape index: {}]
  %s3 = sld [smem:[#allocation0]]
  $region57: #{tpu_custom_call.1} parent=0
    _
  %s5 = ssub.s32 1, %s3
  %s6 = scalar_select 0, %s5, %s3
  $region1: #{tpu_custom_call.1} parent=0
    #allocation3 [shape = 'u8[49152]{0}', space=vmem, size = 0xc000, scoped, tag = 'input window, operand 0']
    #allocation4 [shape = 's32[2]{0}', space=sflag, size = 0x8, scoped, tag = 'scoped memory for tpu_custom_call.1']
    #allocation5 [shape = 'u8[49152]{0}', space=vmem, size = 0xc000, scoped, tag = 'input window, operand 1']
    #allocation6 [shape = 's32[2]{0}', space=sflag, size = 0x8, scoped, tag = 'scoped memory for tpu_custom_call.1']
    %7 = vsyncpa [#allocation4], 0
    %s8 = scalar_lea.sflag [#allocation4], 1
    %9 = vsyncpa %s8, 0
    %10 = vsyncpa [#allocation6], 0
    %s11 = scalar_lea.sflag [#allocation6], 1
    %12 = vsyncpa %s11, 0
    loop: start=0, step=1, limit=4
    $region2: #{tpu_custom_call.1} parent=1 // loop_pre_header
      _
    $region3: #{tpu_custom_call.1} parent=1 // loop_header
      %s14 = sphi 0, %s18
      %p15 = scmp.ge.s32.totalorder %s14, 4
      %s21 = sphi 0, %s33
      %s22 = sphi 0, %s29
      %s23 = sphi 0, %s21
      %s24 = sphi 0, %s22
      %s25 = sphi 0, %s23
      %s26 = sphi 0, %s24
      %s38 = sphi 0, %s40
      %s41 = sphi 0, %s38
      %s42 = sphi 0, %s41
      %s58 = sphi 0, %s42
      %s66 = sphi 0, %s68
      %s69 = sphi 0, %s66
      %s70 = sphi 0, %s69
      %s86 = sphi 0, %s70
      %s92 = sphi 0, %s94
      %s95 = sphi 0, %s92
      %s96 = sphi 0, %s95
      %s112 = sphi 0, %s96
    $region4: #{tpu_custom_call.1} parent=1 // loop_header_branch
      %17 = sbr.rel (%p15) target = $region8
    $region5: #{tpu_custom_call.1} parent=1 // loop_body
      %s19 = ssub.s32 %s14, 1
      %s20 = ssub.s32 %s14, 2
      %s27 = sadd.s32 1, %s22
      %p28 = scmp.ge.s32.totalorder %s27, 1
      %s29 = scalar_select %p28, 0, %s27
      %s30 = sadd.s32 1, %s21
      %s31 = scalar_select %p28, %s30, %s21
      %p32 = scmp.ge.s32.totalorder %s31, 2
      %s33 = scalar_select %p32, 0, %s31
      %s34 = sadd.s32 %s21, %s22
      %s35 = sadd.s32 %s33, %s29
      %s36 = ssub.s32 %s34, %s35
      %p37 = scmp.eq.s32.totalorder %s36, 0
      %s39 = sadd.s32 %s38, 1
      %s40 = scalar_select %p37, %s38, %s39
      %p43 = pneg %p37
      %p44 = scmp.eq.s32.totalorder %s14, 1
      %p45 = por %p43, %p44
      %p46 = scmp.ne.s32.totalorder %s38, %s41
      %p47 = scmp.eq.s32.totalorder %s14, 0
      %p48 = por %p46, %p47
      %p49 = scmp.ne.s32.totalorder %s38, %s41
      %p50 = scmp.eq.s32.totalorder %s19, 1
      %p51 = por %p49, %p50
      %p52 = scmp.ne.s32.totalorder %s41, %s42
      %p53 = scmp.eq.s32.totalorder %s19, 0
      %p54 = por %p52, %p53
      %p55 = scmp.ne.s32.totalorder %s41, %s42
      %p56 = scmp.eq.s32.totalorder %s20, 1
      %p57 = por %p55, %p56
      %p59 = scmp.ne.s32.totalorder %s42, %s58
      %p60 = scmp.eq.s32.totalorder %s20, 0
      %p61 = por %p59, %p60
      %s62 = sadd.s32 %s21, %s22
      %s63 = sadd.s32 %s33, %s29
      %s64 = ssub.s32 %s62, %s63
      %p65 = scmp.eq.s32.totalorder %s64, 0
      %s67 = sadd.s32 %s66, 1
      %s68 = scalar_select %p65, %s66, %s67
      %p71 = pneg %p65
      %p72 = scmp.eq.s32.totalorder %s14, 1
      %p73 = por %p71, %p72
      %p74 = scmp.ne.s32.totalorder %s66, %s69
      %p75 = scmp.eq.s32.totalorder %s14, 0
      %p76 = por %p74, %p75
      %p77 = scmp.ne.s32.totalorder %s66, %s69
      %p78 = scmp.eq.s32.totalorder %s19, 1
      %p79 = por %p77, %p78
      %p80 = scmp.ne.s32.totalorder %s69, %s70
      %p81 = scmp.eq.s32.totalorder %s19, 0
      %p82 = por %p80, %p81
      %p83 = scmp.ne.s32.totalorder %s69, %s70
      %p84 = scmp.eq.s32.totalorder %s20, 1
      %p85 = por %p83, %p84
      %p87 = scmp.ne.s32.totalorder %s70, %s86
      %p88 = scmp.eq.s32.totalorder %s20, 0
      %p89 = por %p87, %p88
      %s90 = ssub.s32 %s21, %s33
      %p91 = scmp.eq.s32.totalorder %s90, 0
      %s93 = sadd.s32 %s92, 1
      %s94 = scalar_select %p91, %s92, %s93
      %p97 = pneg %p91
      %p98 = scmp.eq.s32.totalorder %s14, 1
      %p99 = por %p97, %p98
      %p100 = scmp.ne.s32.totalorder %s92, %s95
      %p101 = scmp.eq.s32.totalorder %s14, 0
      %p102 = por %p100, %p101
      %p103 = scmp.ne.s32.totalorder %s92, %s95
      %p104 = scmp.eq.s32.totalorder %s19, 1
      %p105 = por %p103, %p104
      %p106 = scmp.ne.s32.totalorder %s95, %s96
      %p107 = scmp.eq.s32.totalorder %s19, 0
      %p108 = por %p106, %p107
      %p109 = scmp.ne.s32.totalorder %s95, %s96
      %p110 = scmp.eq.s32.totalorder %s20, 1
      %p111 = por %p109, %p110
      %p113 = scmp.ne.s32.totalorder %s96, %s112
      %p114 = scmp.eq.s32.totalorder %s20, 0
      %p115 = por %p113, %p114
      %p116 = scmp.le.s32.totalorder 1, %s14
      %p117 = scmp.lt.s32.totalorder %s14, 3
      %p118 = pnand %p116, %p117
      %p119 = pneg %p118
      // Predicated region
      $region9: #{tpu_custom_call.1} parent=5 // pred_check
        _
      $region10: #{tpu_custom_call.1} parent=5 // pred_check_branch
        %121 = sbr.rel (%p118) target = $region12
      $region11: #{tpu_custom_call.1} parent=5 // pred_region
        %s122 = ssub.s32 %s14, 1
      $region12: #{tpu_custom_call.1} parent=5 // pred_fallthru
        _
      %p123 = scmp.lt.s32.totalorder %s14, 2
      // Predicated region
      $region13: #{tpu_custom_call.1} parent=5 // pred_check
        %p124 = pneg %p123
      $region14: #{tpu_custom_call.1} parent=5 // pred_check_branch
        %126 = sbr.rel (%p124) target = $region16
      $region15: #{tpu_custom_call.1} parent=5 // pred_region
        // Predicated region
        $region17: #{tpu_custom_call.1} parent=15 // pred_check
          %p127 = pneg %p48
        $region18: #{tpu_custom_call.1} parent=15 // pred_check_branch
          %129 = sbr.rel (%p127) target = $region20
        $region19: #{tpu_custom_call.1} parent=15 // pred_region
          %s130 = sand.u32 %s38, 1
          %s131 = scalar_lea.sflag [#allocation4], %s130
          %s132 = sand.u32 %s38, 1
          %s133 = smul.addr %s132, 48
          %s134 = scalar_lea.vmem [#allocation3], %s133
          %s135 = sadd.s32 %s21, %s22
          %s136 = smul.u32 3, %s135
          %138 = vsyncadd %s131, 0
          %s139 = smul.addr %s136, 2
          %s140 = smul.addr %s139, 8
          %s141 = scalar_lea.hbm %s0, %s140
          %s142 = sshll.u32 %s141, 4
          %s143 = int_to_ptr.hbm [resolvable:$true] %s142
          %s144 = sshll.u32 %s134, 4
          %s145 = int_to_ptr.vmem [resolvable:$true] %s144
          %150 = dma.hbm_to_vmem [thread:$0]  %s143, 768, %s145, %s131, 128, 128, 8
        $region20: #{tpu_custom_call.1} parent=15 // pred_fallthru
          _
        // Predicated region
        $region21: #{tpu_custom_call.1} parent=15 // pred_check
          %p151 = pneg %p76
        $region22: #{tpu_custom_call.1} parent=15 // pred_check_branch
          %153 = sbr.rel (%p151) target = $region24
        $region23: #{tpu_custom_call.1} parent=15 // pred_region
          %s154 = sand.u32 %s66, 1
          %s155 = scalar_lea.sflag [#allocation6], %s154
          %s156 = sand.u32 %s66, 1
          %s157 = smul.addr %s156, 48
          %s158 = scalar_lea.vmem [#allocation5], %s157
          %s159 = sadd.s32 %s21, %s22
          %s160 = smul.u32 3, %s159
          %162 = vsyncadd %s155, 0
          %s163 = smul.addr %s160, 2
          %s164 = smul.addr %s163, 8
          %s165 = scalar_lea.hbm %s1, %s164
          %s166 = sshll.u32 %s165, 4
          %s167 = int_to_ptr.hbm [resolvable:$true] %s166
          %s168 = sshll.u32 %s158, 4
          %s169 = int_to_ptr.vmem [resolvable:$true] %s168
          %174 = dma.hbm_to_vmem [thread:$0]  %s167, 768, %s169, %s155, 128, 128, 8
        $region24: #{tpu_custom_call.1} parent=15 // pred_fallthru
          _
      $region16: #{tpu_custom_call.1} parent=5 // pred_fallthru
        _
      %p175 = scmp.le.s32.totalorder 1, %s14
      %p176 = scmp.lt.s32.totalorder %s14, 3
      %p177 = pnand %p175, %p176
      %p178 = pneg %p177
      // Predicated region
      $region25: #{tpu_custom_call.1} parent=5 // pred_check
        _
      $region26: #{tpu_custom_call.1} parent=5 // pred_check_branch
        %180 = sbr.rel (%p177) target = $region28
      $region27: #{tpu_custom_call.1} parent=5 // pred_region
        %s181 = ssub.s32 %s14, 1
        %s182 = sand.u32 %s41, 1
        %s183 = scalar_lea.sflag [#allocation4], %s182
        %s184 = sand.u32 %s41, 1
        %s185 = smul.addr %s184, 48
        %s186 = scalar_lea.vmem [#allocation3], %s185
        // Predicated region
        $region29: #{tpu_custom_call.1} parent=27 // pred_check
          %p187 = pneg %p54
        $region30: #{tpu_custom_call.1} parent=27 // pred_check_branch
          %189 = sbr.rel (%p187) target = $region32
        $region31: #{tpu_custom_call.1} parent=27 // pred_region
          %191 = dma.done %s183, 768
        $region32: #{tpu_custom_call.1} parent=27 // pred_fallthru
          _
        %s192 = sand.u32 %s69, 1
        %s193 = scalar_lea.sflag [#allocation6], %s192
        %s194 = sand.u32 %s69, 1
        %s195 = smul.addr %s194, 48
        %s196 = scalar_lea.vmem [#allocation5], %s195
        // Predicated region
        $region33: #{tpu_custom_call.1} parent=27 // pred_check
          %p197 = pneg %p82
        $region34: #{tpu_custom_call.1} parent=27 // pred_check_branch
          %199 = sbr.rel (%p197) target = $region36
        $region35: #{tpu_custom_call.1} parent=27 // pred_region
          %201 = dma.done %s193, 768
        $region36: #{tpu_custom_call.1} parent=27 // pred_fallthru
          _
        %s202 = sand.u32 %s41, 1
        %s203 = scalar_lea.sflag [#allocation4], %s202
        %s204 = sand.u32 %s41, 1
        %s205 = smul.addr %s204, 48
        %s206 = scalar_lea.vmem [#allocation3], %s205
        %p207 = pneg %p54
        %p208 = pneg %p51
        %s209 = sand.u32 %s69, 1
        %s210 = scalar_lea.sflag [#allocation6], %s209
        %s211 = sand.u32 %s69, 1
        %s212 = smul.addr %s211, 48
        %s213 = scalar_lea.vmem [#allocation5], %s212
        %p214 = pneg %p82
        %p215 = pneg %p79
        %p216 = pneg %p108
        %p217 = pneg %p105
        %p218 = scmp.lt.s32.totalorder %s23, 1
        %s219 = scalar_select %p218, %s23, 1
        %s220 = scalar_lea.vmem %s2, %s219
        %s221 = sadd.s32 %s23, %s24
        %s222 = smul.u32 3, %s221
        %s223 = sadd.s32 %s23, %s24
        %s224 = smul.u32 3, %s223
        %p225 = scmp.lt.s32.totalorder %s23, 1
        %s226 = scalar_select %p225, %s23, 1
        %s227 = scalar_lea.vmem %s2, %s226
        %p228 = scmp.eq.s32.totalorder %s24, 0
        // Predicated region
        $region37: #{tpu_custom_call.1} parent=27 // pred_check
          %p229 = pneg %p228
        $region38: #{tpu_custom_call.1} parent=27 // pred_check_branch
          %231 = sbr.rel (%p229) target = $region40
        $region39: #{tpu_custom_call.1} parent=27 // pred_region
          %vm232 = vcmask 130048
          %233 = vst.msk [vmem:[#allocation2] sm:$0xff] %vm232, 0.0
          %234 = vst.msk [vmem:[#allocation2 + $0x8] sm:$0xff] %vm232, 0.0
          %235 = vst.msk [vmem:[#allocation2 + $0x10] sm:$0xff] %vm232, 0.0
          %236 = vst.msk [vmem:[#allocation2 + $0x18] sm:$0xff] %vm232, 0.0
          %237 = vst.msk [vmem:[#allocation2 + $0x20] sm:$0xff] %vm232, 0.0
          %238 = vst.msk [vmem:[#allocation2 + $0x28] sm:$0xff] %vm232, 0.0
        $region40: #{tpu_custom_call.1} parent=27 // pred_fallthru
          _
        %v239 = vld [vmem:[%s186] sm:$0xff]
        %v240 = vld [vmem:[%s186 + $0x8] sm:$0xff]
        %v241 = vld [vmem:[%s186 + $0x10] sm:$0xff]
        %v242 = vld [vmem:[%s186 + $0x18] sm:$0xff]
        %v243 = vld [vmem:[%s186 + $0x20] sm:$0xff]
        %v244 = vld [vmem:[%s186 + $0x28] sm:$0xff]
        %v245 = vld [vmem:[%s196] sm:$0xff]
        %v246 = vld [vmem:[%s196 + $0x8] sm:$0xff]
        %v247 = vld [vmem:[%s196 + $0x10] sm:$0xff]
        %v248 = vld [vmem:[%s196 + $0x18] sm:$0xff]
        %v249 = vld [vmem:[%s196 + $0x20] sm:$0xff]
        %v250 = vld [vmem:[%s196 + $0x28] sm:$0xff]
        %v251 = vsub.f32 %v239, %v245
        %v252 = vsub.f32 %v240, %v246
        %v253 = vsub.f32 %v241, %v247
        %v254 = vsub.f32 %v242, %v248
        %v255 = vsub.f32 %v243, %v249
        %v256 = vsub.f32 %v244, %v250
        %263 = vrot.lane.b32.xlu0 %v251, 1
        %v264 = vpop.permute.xlu0 %263
        %265 = vrot.lane.b32.xlu0 %v252, 1
        %v266 = vpop.permute.xlu0 %265
        %267 = vrot.lane.b32.xlu0 %v253, 1
        %v268 = vpop.permute.xlu0 %267
        %269 = vrot.lane.b32.xlu0 %v254, 1
        %v270 = vpop.permute.xlu0 %269
        %271 = vrot.lane.b32.xlu0 %v255, 1
        %v272 = vpop.permute.xlu0 %271
        %273 = vrot.lane.b32.xlu0 %v256, 1
        %v274 = vpop.permute.xlu0 %273
        %vm281 = vcmask 7168
        %v282 = vsel %vm281, 0.0, %v264
        %v283 = vsel %vm281, 0.0, %v266
        %v284 = vsel %vm281, 0.0, %v268
        %v285 = vsel %vm281, 0.0, %v270
        %v286 = vsel %vm281, 0.0, %v272
        %v287 = vsel %vm281, 0.0, %v274
        %288 = vrot.lane.b32.xlu0 %v251, 127
        %v289 = vpop.permute.xlu0 %288
        %290 = vrot.lane.b32.xlu0 %v252, 127
        %v291 = vpop.permute.xlu0 %290
        %292 = vrot.lane.b32.xlu0 %v253, 127
        %v293 = vpop.permute.xlu0 %292
        %294 = vrot.lane.b32.xlu0 %v254, 127
        %v295 = vpop.permute.xlu0 %294
        %296 = vrot.lane.b32.xlu0 %v255, 127
        %v297 = vpop.permute.xlu0 %296
        %298 = vrot.lane.b32.xlu0 %v256, 127
        %v299 = vpop.permute.xlu0 %298
        %vm306 = vcmask 121856
        %v307 = vsel %vm306, %v289, 0.0
        %v308 = vsel %vm306, %v291, 0.0
        %v309 = vsel %vm306, %v293, 0.0
        %v310 = vsel %vm306, %v295, 0.0
        %v311 = vsel %vm306, %v297, 0.0
        %v312 = vsel %vm306, %v299, 0.0
        %v313 = vmul.f32 %v251, 0.36166447
        %v314 = vmul.f32 %v252, 0.36166447
        %v315 = vmul.f32 %v253, 0.36166447
        %v316 = vmul.f32 %v254, 0.36166447
        %v317 = vmul.f32 %v255, 0.36166447
        %v318 = vmul.f32 %v256, 0.36166447
        %v319 = vadd.f32 %v282, %v307
        %v320 = vadd.f32 %v283, %v308
        %v321 = vadd.f32 %v284, %v309
        %v322 = vadd.f32 %v285, %v310
        %v323 = vadd.f32 %v286, %v311
        %v324 = vadd.f32 %v287, %v312
        %v325 = vmul.f32 %v319, 0.31916776
        %v326 = vmul.f32 %v320, 0.31916776
        %v327 = vmul.f32 %v321, 0.31916776
        %v328 = vmul.f32 %v322, 0.31916776
        %v329 = vmul.f32 %v323, 0.31916776
        %v330 = vmul.f32 %v324, 0.31916776
        %v331 = vadd.f32 %v313, %v325
        %v332 = vadd.f32 %v314, %v326
        %v333 = vadd.f32 %v315, %v327
        %v334 = vadd.f32 %v316, %v328
        %v335 = vadd.f32 %v317, %v329
        %v336 = vadd.f32 %v318, %v330
        %vm343 = vcmask 1040384
        %v344 = vrot.slane %v331, 7
        %v345 = vrot.slane %v332, 7
        %v346 = vsel %vm343, %v344, %v345
        %v347 = vrot.slane %v333, 7
        %v348 = vrot.slane %v334, 7
        %v349 = vsel %vm343, %v347, %v348
        %v350 = vrot.slane %v335, 7
        %v351 = vrot.slane %v336, 7
        %v352 = vsel %vm343, %v350, %v351
        %v359 = vsel %vm343, 0.0, %v344
        %v360 = vsel %vm343, 0.0, %v347
        %v361 = vsel %vm343, 0.0, %v350
        %vm362 = vcmask 1046528
        %v363 = vrot.slane %v331, 1
        %v364 = vrot.slane %v332, 1
        %v365 = vsel %vm362, %v363, %v364
        %v366 = vrot.slane %v333, 1
        %v367 = vrot.slane %v334, 1
        %v368 = vsel %vm362, %v366, %v367
        %v369 = vrot.slane %v335, 1
        %v370 = vrot.slane %v336, 1
        %v371 = vsel %vm362, %v369, %v370
        %v378 = vsel %vm362, %v364, 0.0
        %v379 = vsel %vm362, %v367, 0.0
        %v380 = vsel %vm362, %v370, 0.0
        %v381 = vmul.f32 %v331, 0.36166447
        %v382 = vmul.f32 %v332, 0.36166447
        %v383 = vmul.f32 %v333, 0.36166447
        %v384 = vmul.f32 %v334, 0.36166447
        %v385 = vmul.f32 %v335, 0.36166447
        %v386 = vmul.f32 %v336, 0.36166447
        %v387 = vadd.f32 %v359, %v365
        %v388 = vadd.f32 %v346, %v378
        %v389 = vadd.f32 %v360, %v368
        %v390 = vadd.f32 %v349, %v379
        %v391 = vadd.f32 %v361, %v371
        %v392 = vadd.f32 %v352, %v380
        %v393 = vmul.f32 %v387, 0.31916776
        %v394 = vmul.f32 %v388, 0.31916776
        %v395 = vmul.f32 %v389, 0.31916776
        %v396 = vmul.f32 %v390, 0.31916776
        %v397 = vmul.f32 %v391, 0.31916776
        %v398 = vmul.f32 %v392, 0.31916776
        %v399 = vadd.f32 %v381, %v393
        %v400 = vadd.f32 %v382, %v394
        %v401 = vadd.f32 %v383, %v395
        %v402 = vadd.f32 %v384, %v396
        %v403 = vadd.f32 %v385, %v397
        %v404 = vadd.f32 %v386, %v398
        %v405 = vld [vmem:[#allocation2] sm:$0xff]
        %v406 = vld [vmem:[#allocation2 + $0x8] sm:$0xff]
        %v407 = vld [vmem:[#allocation2 + $0x10] sm:$0xff]
        %v408 = vld [vmem:[#allocation2 + $0x18] sm:$0xff]
        %v409 = vld [vmem:[#allocation2 + $0x20] sm:$0xff]
        %v410 = vld [vmem:[#allocation2 + $0x28] sm:$0xff]
        %v411 = vmul.f32 %v399, %v399
        %v412 = vmul.f32 %v400, %v400
        %v413 = vmul.f32 %v401, %v401
        %v414 = vmul.f32 %v402, %v402
        %v415 = vmul.f32 %v403, %v403
        %v416 = vmul.f32 %v404, %v404
        %v417 = vadd.f32 %v405, %v411
        %v418 = vadd.f32 %v406, %v412
        %v419 = vadd.f32 %v407, %v413
        %v420 = vadd.f32 %v408, %v414
        %v421 = vadd.f32 %v409, %v415
        %v422 = vadd.f32 %v410, %v416
        %vm423 = vcmask 130048
        %424 = vst.msk [vmem:[#allocation2] sm:$0xff] %vm423, %v417
        %425 = vst.msk [vmem:[#allocation2 + $0x8] sm:$0xff] %vm423, %v418
        %426 = vst.msk [vmem:[#allocation2 + $0x10] sm:$0xff] %vm423, %v419
        %427 = vst.msk [vmem:[#allocation2 + $0x18] sm:$0xff] %vm423, %v420
        %428 = vst.msk [vmem:[#allocation2 + $0x20] sm:$0xff] %vm423, %v421
        %429 = vst.msk [vmem:[#allocation2 + $0x28] sm:$0xff] %vm423, %v422
        // Predicated region
        $region41: #{tpu_custom_call.1} parent=27 // pred_check
          %p430 = pneg %p228
        $region42: #{tpu_custom_call.1} parent=27 // pred_check_branch
          %432 = sbr.rel (%p430) target = $region44
        $region43: #{tpu_custom_call.1} parent=27 // pred_region
          %v433 = vld [vmem:[#allocation2] sm:$0xff]
          %v434 = vld [vmem:[#allocation2 + $0x8] sm:$0xff]
          %v435 = vld [vmem:[#allocation2 + $0x10] sm:$0xff]
          %v436 = vld [vmem:[#allocation2 + $0x18] sm:$0xff]
          %v437 = vld [vmem:[#allocation2 + $0x20] sm:$0xff]
          %v438 = vld [vmem:[#allocation2 + $0x28] sm:$0xff]
          %v439 = vsel %vm423, %v433, 0.0
          %v440 = vsel %vm423, %v434, 0.0
          %v441 = vadd.f32 %v439, %v440
          %v442 = vsel %vm423, %v435, 0.0
          %v443 = vadd.f32 %v441, %v442
          %v444 = vsel %vm423, %v436, 0.0
          %v445 = vadd.f32 %v443, %v444
          %v446 = vsel %vm423, %v437, 0.0
          %v447 = vadd.f32 %v445, %v446
          %v448 = vsel %vm423, %v438, 0.0
          %v449 = vadd.f32 %v447, %v448
          %450 = vadd.xlane.f32.xlu0 %v449
          %v451 = vpop.xlane.xlu0 %450
          %v452 = vrot.slane %v451, 4
          %v453 = vadd.f32 %v451, %v452
          %v454 = vrot.slane %v453, 2
          %v455 = vadd.f32 %v453, %v454
          %v456 = vrot.slane %v455, 1
          %v457 = vadd.f32 %v455, %v456
          %s458 = vtos %v457
          %v459 = vstv %s458
          %vm460 = vcmask 0
          %461 = vst.msk [vmem:[%s227] sm:$0x1] %vm460, %v459
        $region44: #{tpu_custom_call.1} parent=27 // pred_fallthru
          _
        %p462 = scmp.lt.s32.totalorder %s23, 1
        %s463 = scalar_select %p462, %s23, 1
        %s464 = scalar_lea.vmem %s2, %s463
        // Predicated region
        $region45: #{tpu_custom_call.1} parent=27 // pred_check
          %p465 = pneg %p105
        $region46: #{tpu_custom_call.1} parent=27 // pred_check_branch
          %467 = sbr.rel (%p465) target = $region48
        $region47: #{tpu_custom_call.1} parent=27 // pred_region
          _
        $region48: #{tpu_custom_call.1} parent=27 // pred_fallthru
          _
      $region28: #{tpu_custom_call.1} parent=5 // pred_fallthru
        _
      %p468 = scmp.le.s32.totalorder 2, %s14
      // Predicated region
      $region49: #{tpu_custom_call.1} parent=5 // pred_check
        %p469 = pneg %p468
      $region50: #{tpu_custom_call.1} parent=5 // pred_check_branch
        %471 = sbr.rel (%p469) target = $region52
      $region51: #{tpu_custom_call.1} parent=5 // pred_region
        %s472 = ssub.s32 %s14, 2
        // Predicated region
        $region53: #{tpu_custom_call.1} parent=51 // pred_check
          %p473 = pneg %p111
        $region54: #{tpu_custom_call.1} parent=51 // pred_check_branch
          %475 = sbr.rel (%p473) target = $region56
        $region55: #{tpu_custom_call.1} parent=51 // pred_region
          %p476 = scmp.lt.s32.totalorder %s25, 1
          %s477 = scalar_select %p476, %s25, 1
          %s478 = scalar_lea.vmem %s2, %s477
        $region56: #{tpu_custom_call.1} parent=51 // pred_fallthru
          _
      $region52: #{tpu_custom_call.1} parent=5 // pred_fallthru
        _
    $region6: #{tpu_custom_call.1} parent=1 // loop_footer
      %s18 = sadd.s32 1, %s14
    $region7: #{tpu_custom_call.1} parent=1 // loop_footer_branch
      %13 = sbr.rel target = $region3
    $region8: #{tpu_custom_call.1} parent=1 // loop_exit
      _
    %479 = vsyncpa [#allocation4], 1
    %s480 = scalar_lea.sflag [#allocation4], 1
    %481 = vsyncpa %s480, 1
    %482 = vsyncpa [#allocation6], 1
    %s483 = scalar_lea.sflag [#allocation6], 1
    %484 = vsyncpa %s483, 1

</llo_original>
